<compile_context>
chip_gen: v5e
topology: v5e:2x2
jax: 0.10.0
libtpu: 0.0.40
codegen_flags: <defaults>
</compile_context>

<pallas_src>
import functools
import math

import jax
import jax.numpy as jnp
from jax.experimental import pallas as pl
from jax.experimental.pallas import tpu as pltpu


def _round_up(x, m):
    return ((x + m - 1) // m) * m


# ---------------------------------------------------------------------------
# One-time chip / capability detection.
# ---------------------------------------------------------------------------
@functools.lru_cache(maxsize=None)
def _chip_info():
    kind = ""
    try:
        kind = jax.devices()[0].device_kind.lower()
    except Exception:
        pass
    vmem_cap = None
    try:
        vmem_cap = int(pltpu.get_tpu_info().vmem_capacity_bytes)
    except Exception:
        vmem_cap = None
    is_v7 = "v7" in kind
    is_old = any(v in kind for v in ("v2", "v3", "v4", "v5"))
    if vmem_cap is None:
        vmem_cap = (64 << 20) if is_v7 else (128 << 20)
    default_scoped = (16 << 20) if is_old else (32 << 20)   # default scoped VMEM limit
    mxu_width = 128 if is_old else 256                      # 4x128^2 vs 2x256^2 MXU
    return vmem_cap, default_scoped, mxu_width


@functools.lru_cache(maxsize=None)
def _pipeline_mode_supported():
    """One-time probe: does this build accept BlockSpec(pipeline_mode=pl.Buffered(1))?"""
    if not hasattr(pl, "Buffered"):
        return False
    try:
        spec = pl.BlockSpec((8, 128), lambda i: (0, 0), pipeline_mode=pl.Buffered(1))

        def _copy(x_ref, o_ref):
            o_ref[...] = x_ref[...]

        out = pl.pallas_call(
            _copy,
            out_shape=jax.ShapeDtypeStruct((8, 128), jnp.float32),
            grid_spec=pltpu.PrefetchScalarGridSpec(
                num_scalar_prefetch=0, grid=(1,),
                in_specs=[spec],
                out_specs=pl.BlockSpec((8, 128), lambda i: (0, 0))),
        )(jnp.zeros((8, 128), jnp.float32))
        jax.block_until_ready(out)
        return True
    except Exception:
        return False


# ---------------------------------------------------------------------------
# Kernels.
# ---------------------------------------------------------------------------
def _mlp_kernel_resident(x_ref, w1_ref, b1_ref, w2_ref, b2_ref, o_ref):
    # fc1 on the MXU with f32 accumulation; bias + ReLU epilogue in f32 (VPU).
    h = jnp.dot(x_ref[...], w1_ref[...], preferred_element_type=jnp.float32)
    h = jnp.maximum(h + b1_ref[...], 0.0)
    # Intermediate cast to the weight dtype (bf16 when bf16 matmuls are on):
    # halves intermediate VMEM / store pressure and feeds the MXU natively.
    o = jnp.dot(h.astype(w2_ref.dtype), w2_ref[...], preferred_element_type=jnp.float32)
    o_ref[...] = (o + b2_ref[...]).astype(o_ref.dtype)
    # Dropout(p=0.0) is the identity (matches nn.Dropout(0.0)).
    # TODO(synk): for p>0 training-mode dropout add pltpu.prng_seed +
    #             pltpu.stateful_bernoulli masking here.


def _mlp_kernel_streamed(x_ref, w1_ref, b1_ref, w2_ref, b2_ref, o_ref, acc_ref):
    # Grid = (M tiles [parallel], hid chunks [arbitrary]).  ReLU is elementwise
    # per hidden unit, so fc2 = sum_k ReLU(x @ W1[:,k] + b1[k]) @ W2[k,:] is
    # exact per hid chunk.
    k = pl.program_id(1)

    @pl.when(k == 0)
    def _():
        acc_ref[...] = jnp.zeros_like(acc_ref)

    h = jnp.dot(x_ref[...], w1_ref[...], preferred_element_type=jnp.float32)
    h = jnp.maximum(h + b1_ref[...], 0.0)
    acc_ref[...] += jnp.dot(h.astype(w2_ref.dtype), w2_ref[...],
                            preferred_element_type=jnp.float32)

    @pl.when(k == pl.num_programs(1) - 1)
    def _():
        o_ref[...] = (acc_ref[...] + b2_ref[...]).astype(o_ref.dtype)


# ---------------------------------------------------------------------------
# Wrapper.
# ---------------------------------------------------------------------------
def mlp_forward(x, w1, b1, w2, b2, *, tm=None, matmul_dtype=None):
    """Fused MLP: fc1 -> ReLU -> fc2 -> dropout(p=0).

    x: (batch, seq, in_feat); w1: (in_feat, hid); w2: (hid, out_feat).
    matmul_dtype: operand dtype for both MXU matmuls (accumulation is always
      f32).  Defaults to x.dtype (numerically exact vs. the f32 reference);
      pass jnp.bfloat16 for peak MXU throughput on v6e/v7x.
    """
    batch, seq, in_feat = x.shape
    hid = w1.shape[1]
    out_feat = w2.shape[1]
    M = batch * seq
    out_dtype = x.dtype

    vmem_cap, default_scoped, mxu_width = _chip_info()
    mm_dtype = jnp.dtype(matmul_dtype) if matmul_dtype is not None else jnp.dtype(x.dtype)
    mm_isz = mm_dtype.itemsize
    out_isz = jnp.dtype(out_dtype).itemsize

    # Lane-dense feature padding: 128 always; full MXU group width (256 on
    # v6e/v7x) once the dim exceeds one lane group.  Zero padding is exact for
    # this MLP (padded x cols are 0; padded hidden units: ReLU(0)=0 -> no fc2
    # contribution; padded output cols sliced off).
    def feat_pad(d):
        align = mxu_width if d > 128 else 128
        return _round_up(d, align)

    in_p, hid_p, out_p = feat_pad(in_feat), feat_pad(hid), feat_pad(out_feat)

    use_sb = _pipeline_mode_supported()          # single-buffer resident weights?
    wt_buf = 1 if use_sb else 2

    # Resident-weight footprint (weights in mm_dtype, biases f32).
    resident_w_bytes = wt_buf * ((in_p * hid_p + hid_p * out_p) * mm_isz
                                 + (hid_p + out_p) * 4)
    # Stream hid chunks when resident weights would crowd VMEM (v7x: 64 MiB).
    stream_hid = resident_w_bytes > int(0.65 * vmem_cap)
    if stream_hid:
        thid = min(hid_p, 512)                   # multiple of 128 and 256
        hid_p = _round_up(hid_p, thid)
    else:
        thid = hid_p

    # M tile: bigger on 128-MiB-VMEM gens (v5e/v6e), smaller on v7x (64 MiB).
    if tm is None:
        tm = 512 if vmem_cap >= (96 << 20) else 256
    tm = max(16, min(_round_up(tm, 16), _round_up(M, 16)))
    # Keep >=2 M steps when M allows so the "parallel" axis shards across both
    # TensorCores on v7x (no-op harm on 1-TC chips).
    if M > 16 and pl.cdiv(M, tm) < 2:
        tm = max(16, _round_up(pl.cdiv(M, 2), 16))

    if stream_hid:
        # Per-step streamed weight blocks, double-buffered.
        step_w_bytes = (2 * (in_p * thid + thid * out_p) * mm_isz
                        + 2 * thid * 4 + wt_buf * out_p * 4)
    else:
        step_w_bytes = resident_w_bytes

    def tile_bytes(t):
        act = 2 * t * (in_p * mm_isz + out_p * out_isz)        # pipelined x / out tiles
        scratch = 4 * t * (thid + out_p)                       # f32 intermediates
        if stream_hid:
            scratch += 4 * t * out_p                           # persistent f32 accumulator
        return act + scratch

    while tm > 64 and step_w_bytes + tile_bytes(tm) > int(0.9 * vmem_cap):
        tm = max(64, tm // 2)

    m_tiles = pl.cdiv(M, tm)                     # no M padding; partial block is masked

    # ----- inputs (pad / cast only when needed) -----------------------------
    x2d = x.reshape(M, in_feat)
    if x2d.dtype != mm_dtype:
        x2d = x2d.astype(mm_dtype)
    if in_p != in_feat:
        x2d = jnp.pad(x2d, ((0, 0), (0, in_p - in_feat)))

    def prep_w(w, rows, cols, rp, cp):
        if w.dtype != mm_dtype:
            w = w.astype(mm_dtype)
        if (rp, cp) != (rows, cols):
            w = jnp.pad(w, ((0, rp - rows), (0, cp - cols)))
        return w

    def prep_b(b, n, n_p):
        b = b.reshape(1, n)
        if b.dtype != jnp.float32:
            b = b.astype(jnp.float32)            # bias added in the f32 epilogue
        if n_p != n:
            b = jnp.pad(b, ((0, 0), (0, n_p - n)))
        return b

    w1_p = prep_w(w1, in_feat, hid, in_p, hid_p)
    w2_p = prep_w(w2, hid, out_feat, hid_p, out_p)
    b1_p = prep_b(b1, hid, hid_p)
    b2_p = prep_b(b2, out_feat, out_p)

    # ----- cost estimate / VMEM limit ---------------------------------------
    flops = 2 * M * (in_p * hid_p + hid_p * out_p)
    bytes_accessed = ((x2d.size + w1_p.size + w2_p.size) * mm_isz
                      + (b1_p.size + b2_p.size) * 4 + M * out_p * out_isz)
    cost = pl.CostEstimate(flops=flops, transcendentals=0, bytes_accessed=bytes_accessed)

    vmem_needed = step_w_bytes + tile_bytes(tm)
    vmem_limit = None
    if vmem_needed > int(0.9 * default_scoped):
        vmem_limit = min(_round_up(int(vmem_needed * 1.25), 1 << 20),
                         int(0.9 * vmem_cap))

    sb = dict(pipeline_mode=pl.Buffered(1)) if use_sb else {}

    # TODO(synk): if profiling shows exposed DMA on the streaming x tile for
    #             small-hid configs, raise it to pipeline_mode=pl.Buffered(3).
    if not stream_hid:
        grid = (m_tiles,)
        in_specs = [
            pl.BlockSpec((tm, in_p), lambda i: (i, 0)),                          # x tile
            pl.BlockSpec((in_p, hid_p), lambda i: (0, 0), **sb),                 # W1 (resident)
            pl.BlockSpec((1, hid_p), lambda i: (0, 0), **sb),                    # b1
            pl.BlockSpec((hid_p, out_p), lambda i: (0, 0), **sb),                # W2 (resident)
            pl.BlockSpec((1, out_p), lambda i: (0, 0), **sb),                    # b2
        ]
        out_specs = pl.BlockSpec((tm, out_p), lambda i: (i, 0))
        kernel = _mlp_kernel_resident
        scratch_shapes = ()
        dim_sem = ("parallel",)
    else:
        grid = (m_tiles, hid_p // thid)
        in_specs = [
            pl.BlockSpec((tm, in_p), lambda i, k: (i, 0)),                       # x tile (const in k)
            pl.BlockSpec((in_p, thid), lambda i, k: (0, k)),                     # W1[:, k] streamed
            pl.BlockSpec((1, thid), lambda i, k: (0, k)),                        # b1[k]
            pl.BlockSpec((thid, out_p), lambda i, k: (k, 0)),                    # W2[k, :] streamed
            pl.BlockSpec((1, out_p), lambda i, k: (0, 0), **sb),                 # b2
        ]
        out_specs = pl.BlockSpec((tm, out_p), lambda i, k: (i, 0))
        kernel = _mlp_kernel_streamed
        scratch_shapes = (pltpu.VMEM((tm, out_p), jnp.float32),)
        dim_sem = ("parallel", "arbitrary")

    out2d = pl.pallas_call(
        kernel,
        out_shape=jax.ShapeDtypeStruct((M, out_p), out_dtype),
        grid_spec=pltpu.PrefetchScalarGridSpec(
            num_scalar_prefetch=0,
            grid=grid,
            in_specs=in_specs,
            out_specs=out_specs,
            scratch_shapes=scratch_shapes,
        ),
        compiler_params=pltpu.CompilerParams(
            dimension_semantics=dim_sem,
            vmem_limit_bytes=vmem_limit,
        ),
        cost_estimate=cost,
    )(x2d, w1_p, b1_p, w2_p, b2_p)

    if out_p != out_feat:
        out2d = out2d[:, :out_feat]
    return out2d.reshape(batch, seq, out_feat)


def init_mlp_params(key, in_feat, hid_feat, out_feat, dtype=jnp.float32):
    """Deterministic init matching nn.Linear's default U(-1/sqrt(fan_in), +)."""
    k1, k2, k3, k4 = jax.random.split(key, 4)
    bound1 = 1.0 / math.sqrt(in_feat)
    bound2 = 1.0 / math.sqrt(hid_feat)
    # Weights stored already transposed: (in, hid) and (hid, out).
    w1 = jax.random.uniform(k1, (in_feat, hid_feat), dtype, -bound1, bound1)
    b1 = jax.random.uniform(k2, (hid_feat,), dtype, -bound1, bound1)
    w2 = jax.random.uniform(k3, (hid_feat, out_feat), dtype, -bound2, bound2)
    b2 = jax.random.uniform(k4, (out_feat,), dtype, -bound2, bound2)
    return w1, b1, w2, b2


if __name__ == "__main__":
    batch, seq, in_feat, hid_feat, out_feat = 2, 8, 32, 64, 32

    key = jax.random.PRNGKey(0)
    kx, kp = jax.random.split(key)
    x = jax.random.normal(kx, (batch, seq, in_feat), jnp.float32)
    w1, b1, w2, b2 = init_mlp_params(kp, in_feat, hid_feat, out_feat)

    # Pure-JAX reference of the same math (dropout p=0 is identity).
    ref = jnp.maximum(x.reshape(-1, in_feat) @ w1 + b1, 0.0) @ w2 + b2
    ref = ref.reshape(batch, seq, out_feat)

    # 1) Exact path: matmul operands in the input dtype (f32).
    out = mlp_forward(x, w1, b1, w2, b2)
    jax.block_until_ready(out)
    assert out.shape == (batch, seq, out_feat)
    assert jnp.allclose(out, ref, atol=1e-5, rtol=1e-5)

    # 2) High-throughput path: bf16 matmul operands, f32 accumulation.
    out_bf16 = mlp_forward(x, w1, b1, w2, b2, matmul_dtype=jnp.bfloat16)
    jax.block_until_ready(out_bf16)
    assert out_bf16.shape == (batch, seq, out_feat)
    assert jnp.allclose(out_bf16, ref, atol=5e-2, rtol=5e-2)

    print("KERNEL_OK")
</pallas_src>

<mosaic_0001>
module attributes {stable_mosaic.version = 11 : i64} {
  func.func @_copy(%arg0: i32, %arg1: memref<8x128xf32, #tpu.memory_space<vmem>>, %arg2: memref<8x128xf32, #tpu.memory_space<vmem>>) attributes {dimension_semantics = [#tpu.dimension_semantics<arbitrary>], iteration_bounds = array<i64: 1>, scalar_prefetch = 0 : i64, scratch_operands = 0 : i64, tpu.core_type = #tpu.core_type<tc>, window_params = [{pipeline_mode = #tpu.pipeline_mode<synchronous>, transform_indices = @transform_0, window_bounds = array<i64: 8, 128>}, {pipeline_mode = #tpu.pipeline_mode<synchronous>, transform_indices = @transform_1, window_bounds = array<i64: 8, 128>}]} {
    %c0 = arith.constant 0 : index
    %c0_0 = arith.constant 0 : index
    %0 = vector.load %arg1[%c0, %c0_0] : memref<8x128xf32, #tpu.memory_space<vmem>>, vector<8x128xf32>
    %c0_1 = arith.constant 0 : index
    %c0_2 = arith.constant 0 : index
    %1 = vector.load %arg2[%c0_1, %c0_2] : memref<8x128xf32, #tpu.memory_space<vmem>>, vector<8x128xf32>
    tpu.vector_store %arg2[%c0_1, %c0_2], %0 {strides = array<i32>} : memref<8x128xf32, #tpu.memory_space<vmem>>, vector<8x128xf32>,
    return
  }
  func.func @transform_0(%arg0: i32) -> (i32, i32) {
    %c0_i32 = arith.constant 0 : i32
    %c0_i32_0 = arith.constant 0 : i32
    %c0_i32_1 = arith.constant 0 : i32
    return %c0_i32, %c0_i32_0 : i32, i32
  }
  func.func @transform_1(%arg0: i32) -> (i32, i32) {
    %c0_i32 = arith.constant 0 : i32
    %c0_i32_0 = arith.constant 0 : i32
    %c0_i32_1 = arith.constant 0 : i32
    return %c0_i32, %c0_i32_0 : i32, i32
  }
}

module attributes {stable_mosaic.version = 11 : i64} {
  func.func @_mlp_kernel_resident(%arg0: i32, %arg1: memref<16x128xf32, #tpu.memory_space<vmem>>, %arg2: memref<128x128xf32, #tpu.memory_space<vmem>>, %arg3: memref<1x128xf32, #tpu.memory_space<vmem>>, %arg4: memref<128x128xf32, #tpu.memory_space<vmem>>, %arg5: memref<1x128xf32, #tpu.memory_space<vmem>>, %arg6: memref<16x128xf32, #tpu.memory_space<vmem>>) attributes {dimension_semantics = [#tpu.dimension_semantics<parallel>], iteration_bounds = array<i64: 1>, scalar_prefetch = 0 : i64, scratch_operands = 0 : i64, tpu.core_type = #tpu.core_type<tc>, window_params = [{transform_indices = @transform_0, window_bounds = array<i64: 16, 128>}, {pipeline_mode = #tpu.pipeline_mode<synchronous>, transform_indices = @transform_1, window_bounds = array<i64: 128, 128>}, {pipeline_mode = #tpu.pipeline_mode<synchronous>, transform_indices = @transform_2, window_bounds = array<i64: 1, 128>}, {pipeline_mode = #tpu.pipeline_mode<synchronous>, transform_indices = @transform_3, window_bounds = array<i64: 128, 128>}, {pipeline_mode = #tpu.pipeline_mode<synchronous>, transform_indices = @transform_4, window_bounds = array<i64: 1, 128>}, {transform_indices = @transform_5, window_bounds = array<i64: 16, 128>}]} {
    %c0 = arith.constant 0 : index
    %c0_0 = arith.constant 0 : index
    %0 = vector.load %arg1[%c0, %c0_0] : memref<16x128xf32, #tpu.memory_space<vmem>>, vector<16x128xf32>
    %c0_1 = arith.constant 0 : index
    %c0_2 = arith.constant 0 : index
    %1 = vector.load %arg2[%c0_1, %c0_2] : memref<128x128xf32, #tpu.memory_space<vmem>>, vector<128x128xf32>
    %cst = arith.constant dense<0.000000e+00> : vector<16x128xf32>
    %2 = tpu.matmul %0, %1, %cst {dimension_numbers = #tpu.dot_dimension_numbers<[1], [0], [0], [1], [0, 0, 1, 1], [], []>} : vector<16x128xf32>, vector<128x128xf32>, vector<16x128xf32> -> vector<16x128xf32>
    %c0_3 = arith.constant 0 : index
    %c0_4 = arith.constant 0 : index
    %3 = vector.load %arg3[%c0_3, %c0_4] : memref<1x128xf32, #tpu.memory_space<vmem>>, vector<1x128xf32>
    %4 = vector.broadcast %3 : vector<1x128xf32> to vector<16x128xf32>
    %5 = arith.addf %2, %4 : vector<16x128xf32>
    %cst_5 = arith.constant 0.000000e+00 : f32
    %6 = vector.broadcast %cst_5 : f32 to vector<16x128xf32>
    %7 = arith.maximumf %5, %6 : vector<16x128xf32>
    %c0_6 = arith.constant 0 : index
    %c0_7 = arith.constant 0 : index
    %8 = vector.load %arg4[%c0_6, %c0_7] : memref<128x128xf32, #tpu.memory_space<vmem>>, vector<128x128xf32>
    %cst_8 = arith.constant dense<0.000000e+00> : vector<16x128xf32>
    %9 = tpu.matmul %7, %8, %cst_8 {dimension_numbers = #tpu.dot_dimension_numbers<[1], [0], [0], [1], [0, 0, 1, 1], [], []>} : vector<16x128xf32>, vector<128x128xf32>, vector<16x128xf32> -> vector<16x128xf32>
    %c0_9 = arith.constant 0 : index
    %c0_10 = arith.constant 0 : index
    %10 = vector.load %arg5[%c0_9, %c0_10] : memref<1x128xf32, #tpu.memory_space<vmem>>, vector<1x128xf32>
    %11 = vector.broadcast %10 : vector<1x128xf32> to vector<16x128xf32>
    %12 = arith.addf %9, %11 : vector<16x128xf32>
    %c0_11 = arith.constant 0 : index
    %c0_12 = arith.constant 0 : index
    %13 = vector.load %arg6[%c0_11, %c0_12] : memref<16x128xf32, #tpu.memory_space<vmem>>, vector<16x128xf32>
    tpu.vector_store %arg6[%c0_11, %c0_12], %12 {strides = array<i32>} : memref<16x128xf32, #tpu.memory_space<vmem>>, vector<16x128xf32>,
    return
  }
  func.func @transform_0(%arg0: i32) -> (i32, i32) {
    %c0_i32 = arith.constant 0 : i32
    %c0_i32_0 = arith.constant 0 : i32
    return %arg0, %c0_i32 : i32, i32
  }
  func.func @transform_1(%arg0: i32) -> (i32, i32) {
    %c0_i32 = arith.constant 0 : i32
    %c0_i32_0 = arith.constant 0 : i32
    %c0_i32_1 = arith.constant 0 : i32
    return %c0_i32, %c0_i32_0 : i32, i32
  }
  func.func @transform_2(%arg0: i32) -> (i32, i32) {
    %c0_i32 = arith.constant 0 : i32
    %c0_i32_0 = arith.constant 0 : i32
    %c0_i32_1 = arith.constant 0 : i32
    return %c0_i32, %c0_i32_0 : i32, i32
  }
  func.func @transform_3(%arg0: i32) -> (i32, i32) {
    %c0_i32 = arith.constant 0 : i32
    %c0_i32_0 = arith.constant 0 : i32
    %c0_i32_1 = arith.constant 0 : i32
    return %c0_i32, %c0_i32_0 : i32, i32
  }
  func.func @transform_4(%arg0: i32) -> (i32, i32) {
    %c0_i32 = arith.constant 0 : i32
    %c0_i32_0 = arith.constant 0 : i32
    %c0_i32_1 = arith.constant 0 : i32
    return %c0_i32, %c0_i32_0 : i32, i32
  }
  func.func @transform_5(%arg0: i32) -> (i32, i32) {
    %c0_i32 = arith.constant 0 : i32
    %c0_i32_0 = arith.constant 0 : i32
    return %arg0, %c0_i32 : i32, i32
  }
}

</mosaic_0001>

<llo_original>
// kernel: tpu_custom_call.1
$region0: #{tpu_custom_call.1}
  #allocation0 [shape = 'u32[]', space=smem, size = 0x4, offset = 0x4, fixed_abs, tag = 'smem constant byte address 0x4 - core index']
  #allocation1 [shape = 'u32[72,128]{1,0:T(1,128)}', space=vmem, size = 0x9000, scoped, tag = 'internal scratch']
  %s0 = inlined_call_operand.hbm [shape: f32[8,128], index: 0, kind: input, shape index: {}]
  %s1 = inlined_call_operand.hbm [shape: f32[8,128], index: 1, kind: output, shape index: {}]
  %s2 = sld [smem:[#allocation0]]
  $region18: #{tpu_custom_call.1} parent=0
    _
  %s4 = ssub.s32 1, %s2
  %s5 = scalar_select 0, %s4, %s2
  $region1: #{tpu_custom_call.1} parent=0
    #allocation2 [shape = 'u8[4096]{0}', space=vmem, size = 0x1000, scoped, tag = 'input window, operand 0, single buffered']
    #allocation3 [shape = 's32[1]{0}', space=sflag, size = 0x4, scoped, tag = 'scoped memory for tpu_custom_call.1']
    #allocation4 [shape = 's32[1]{0}', space=sflag, size = 0x4, scoped, tag = 'scoped memory for tpu_custom_call.1']
    #allocation5 [shape = 'u8[4096]{0}', space=vmem, size = 0x1000, scoped, tag = 'output window, operand 0, single buffered']
    %6 = vsyncpa [#allocation3], 0
    %7 = vsyncpa [#allocation4], 0
    // Predicated region
    $region2: #{tpu_custom_call.1} parent=1 // pred_check
      _
    $region3: #{tpu_custom_call.1} parent=1 // pred_check_branch
      %9 = sbr.rel (0) target = $region5
    $region4: #{tpu_custom_call.1} parent=1 // pred_region
      %11 = vsyncadd [#allocation3], 0
      %s13 = sshll.u32 %s0, 4
      %s14 = int_to_ptr.hbm [resolvable:$true] %s13
      %s15 = sshll.u32 [#allocation2], 4
      %s16 = int_to_ptr.vmem [resolvable:$true] %s15
      %18 = dma.hbm_to_vmem [thread:$0]  %s14, 128, %s16, [#allocation3]
    $region5: #{tpu_custom_call.1} parent=1 // pred_fallthru
      _
    // Predicated region
    $region6: #{tpu_custom_call.1} parent=1 // pred_check
      _
    $region7: #{tpu_custom_call.1} parent=1 // pred_check_branch
      %20 = sbr.rel (0) target = $region9
    $region8: #{tpu_custom_call.1} parent=1 // pred_region
      %22 = dma.done [#allocation3], 128
    $region9: #{tpu_custom_call.1} parent=1 // pred_fallthru
      _
    %v23 = vld [vmem:[#allocation2] sm:$0xff]
    %24 = vst [vmem:[#allocation5] sm:$0xff] %v23
    // Predicated region
    $region10: #{tpu_custom_call.1} parent=1 // pred_check
      _
    $region11: #{tpu_custom_call.1} parent=1 // pred_check_branch
      %26 = sbr.rel (0) target = $region13
    $region12: #{tpu_custom_call.1} parent=1 // pred_region
      %28 = vsyncadd [#allocation4], 0
      %s30 = sshll.u32 [#allocation5], 4
      %s31 = int_to_ptr.vmem [resolvable:$true] %s30
      %s32 = sshll.u32 %s1, 4
      %s33 = int_to_ptr.hbm [resolvable:$true] %s32
      %35 = dma.vmem_to_hbm [thread:$0]  %s31, 128, %s33, [#allocation4]
    $region13: #{tpu_custom_call.1} parent=1 // pred_fallthru
      _
    // Predicated region
    $region14: #{tpu_custom_call.1} parent=1 // pred_check
      _
    $region15: #{tpu_custom_call.1} parent=1 // pred_check_branch
      %37 = sbr.rel (0) target = $region17
    $region16: #{tpu_custom_call.1} parent=1 // pred_region
      %39 = dma.done [#allocation4], 128
    $region17: #{tpu_custom_call.1} parent=1 // pred_fallthru
      _
    %40 = vsyncpa [#allocation3], 1
    %41 = vsyncpa [#allocation4], 1

// kernel: tpu_custom_call.1
$region0: #{tpu_custom_call.1}
  #allocation0 [shape = 'u32[]', space=smem, size = 0x4, offset = 0x4, fixed_abs, tag = 'smem constant byte address 0x4 - core index']
  #allocation1 [shape = 'u32[72,128]{1,0:T(1,128)}', space=vmem, size = 0x9000, scoped, tag = 'internal scratch']
  %s0 = inlined_call_operand.hbm [shape: f32[16,128], index: 0, kind: input, shape index: {}]
  %s1 = inlined_call_operand.hbm [shape: f32[128,128], index: 1, kind: input, shape index: {}]
  %s2 = inlined_call_operand.vmem [shape: f32[1,128], index: 2, kind: input, shape index: {}]
  %s3 = inlined_call_operand.hbm [shape: f32[128,128], index: 3, kind: input, shape index: {}]
  %s4 = inlined_call_operand.vmem [shape: f32[1,128], index: 4, kind: input, shape index: {}]
  %s5 = inlined_call_operand.hbm [shape: f32[16,128], index: 5, kind: output, shape index: {}]
  %s6 = sld [smem:[#allocation0]]
  $region42: #{tpu_custom_call.1} parent=0
    _
  %s8 = ssub.s32 1, %s6
  %s9 = scalar_select 0, %s8, %s6
  $region1: #{tpu_custom_call.1} parent=0
    #allocation2 [shape = 'u8[8192]{0}', space=vmem, size = 0x2000, scoped, tag = 'input window, operand 0, single buffered']
    #allocation3 [shape = 's32[1]{0}', space=sflag, size = 0x4, scoped, tag = 'scoped memory for tpu_custom_call.1']
    #allocation4 [shape = 's32[1]{0}', space=sflag, size = 0x4, scoped, tag = 'scoped memory for tpu_custom_call.1']
    #allocation5 [shape = 'u8[65536]{0}', space=vmem, size = 0x10000, scoped, tag = 'input window, operand 1, single buffered']
    #allocation6 [shape = 's32[1]{0}', space=sflag, size = 0x4, scoped, tag = 'scoped memory for tpu_custom_call.1']
    #allocation7 [shape = 'u8[65536]{0}', space=vmem, size = 0x10000, scoped, tag = 'input window, operand 3, single buffered']
    #allocation8 [shape = 'u8[8192]{0}', space=vmem, size = 0x2000, scoped, tag = 'output window, operand 0, single buffered']
    %10 = vsyncpa [#allocation3], 0
    %11 = vsyncpa [#allocation6], 0
    %12 = vsyncpa [#allocation4], 0
    // Predicated region
    $region2: #{tpu_custom_call.1} parent=1 // pred_check
      _
    $region3: #{tpu_custom_call.1} parent=1 // pred_check_branch
      %14 = sbr.rel (0) target = $region5
    $region4: #{tpu_custom_call.1} parent=1 // pred_region
      %16 = vsyncadd [#allocation3], 0
      %s17 = sshll.u32 %s0, 4
      %s18 = int_to_ptr.hbm [resolvable:$true] %s17
      %s19 = sshll.u32 [#allocation2], 4
      %s20 = int_to_ptr.vmem [resolvable:$true] %s19
      %25 = dma.hbm_to_vmem [thread:$0]  %s18, 256, %s20, [#allocation3], 128, 128, 8
    $region5: #{tpu_custom_call.1} parent=1 // pred_fallthru
      _
    // Predicated region
    $region6: #{tpu_custom_call.1} parent=1 // pred_check
      _
    $region7: #{tpu_custom_call.1} parent=1 // pred_check_branch
      %27 = sbr.rel (0) target = $region9
    $region8: #{tpu_custom_call.1} parent=1 // pred_region
      %29 = vsyncadd [#allocation6], 0
      %s30 = sshll.u32 %s1, 4
      %s31 = int_to_ptr.hbm [resolvable:$true] %s30
      %s32 = sshll.u32 [#allocation5], 4
      %s33 = int_to_ptr.vmem [resolvable:$true] %s32
      %38 = dma.hbm_to_vmem [thread:$0]  %s31, 2048, %s33, [#allocation6], 128, 128, 8
    $region9: #{tpu_custom_call.1} parent=1 // pred_fallthru
      _
    // Predicated region
    $region10: #{tpu_custom_call.1} parent=1 // pred_check
      _
    $region11: #{tpu_custom_call.1} parent=1 // pred_check_branch
      %40 = sbr.rel (0) target = $region13
    $region12: #{tpu_custom_call.1} parent=1 // pred_region
      _
    $region13: #{tpu_custom_call.1} parent=1 // pred_fallthru
      _
    // Predicated region
    $region14: #{tpu_custom_call.1} parent=1 // pred_check
      _
    $region15: #{tpu_custom_call.1} parent=1 // pred_check_branch
      %42 = sbr.rel (0) target = $region17
    $region16: #{tpu_custom_call.1} parent=1 // pred_region
      %44 = vsyncadd [#allocation6], 0
      %s45 = sshll.u32 %s3, 4
      %s46 = int_to_ptr.hbm [resolvable:$true] %s45
      %s47 = sshll.u32 [#allocation7], 4
      %s48 = int_to_ptr.vmem [resolvable:$true] %s47
      %53 = dma.hbm_to_vmem [thread:$0]  %s46, 2048, %s48, [#allocation6], 128, 128, 8
    $region17: #{tpu_custom_call.1} parent=1 // pred_fallthru
      _
    // Predicated region
    $region18: #{tpu_custom_call.1} parent=1 // pred_check
      _
    $region19: #{tpu_custom_call.1} parent=1 // pred_check_branch
      %55 = sbr.rel (0) target = $region21
    $region20: #{tpu_custom_call.1} parent=1 // pred_region
      _
    $region21: #{tpu_custom_call.1} parent=1 // pred_fallthru
      _
    // Predicated region
    $region22: #{tpu_custom_call.1} parent=1 // pred_check
      _
    $region23: #{tpu_custom_call.1} parent=1 // pred_check_branch
      %57 = sbr.rel (0) target = $region25
    $region24: #{tpu_custom_call.1} parent=1 // pred_region
      %59 = dma.done [#allocation3], 256
    $region25: #{tpu_custom_call.1} parent=1 // pred_fallthru
      _
    // Predicated region
    $region26: #{tpu_custom_call.1} parent=1 // pred_check
      _
    $region27: #{tpu_custom_call.1} parent=1 // pred_check_branch
      %61 = sbr.rel (0) target = $region29
    $region28: #{tpu_custom_call.1} parent=1 // pred_region
      %63 = dma.done [#allocation6], 2048
    $region29: #{tpu_custom_call.1} parent=1 // pred_fallthru
      _
    // Predicated region
    $region30: #{tpu_custom_call.1} parent=1 // pred_check
      _
    $region31: #{tpu_custom_call.1} parent=1 // pred_check_branch
      %65 = sbr.rel (0) target = $region33
    $region32: #{tpu_custom_call.1} parent=1 // pred_region
      %67 = dma.done [#allocation6], 2048
    $region33: #{tpu_custom_call.1} parent=1 // pred_fallthru
      _
    %v68 = vld [vmem:[#allocation2] sm:$0xff]
    %v69 = vld [vmem:[#allocation2 + $0x8] sm:$0xff]
    %v70 = vld [vmem:[#allocation5] sm:$0xff]
    %v71 = vld [vmem:[#allocation5 + $0x8] sm:$0xff]
    %v72 = vld [vmem:[#allocation5 + $0x10] sm:$0xff]
    %v73 = vld [vmem:[#allocation5 + $0x18] sm:$0xff]
    %v74 = vld [vmem:[#allocation5 + $0x20] sm:$0xff]
    %v75 = vld [vmem:[#allocation5 + $0x28] sm:$0xff]
    %v76 = vld [vmem:[#allocation5 + $0x30] sm:$0xff]
    %v77 = vld [vmem:[#allocation5 + $0x38] sm:$0xff]
    %v78 = vld [vmem:[#allocation5 + $0x40] sm:$0xff]
    %v79 = vld [vmem:[#allocation5 + $0x48] sm:$0xff]
    %v80 = vld [vmem:[#allocation5 + $0x50] sm:$0xff]
    %v81 = vld [vmem:[#allocation5 + $0x58] sm:$0xff]
    %v82 = vld [vmem:[#allocation5 + $0x60] sm:$0xff]
    %v83 = vld [vmem:[#allocation5 + $0x68] sm:$0xff]
    %v84 = vld [vmem:[#allocation5 + $0x70] sm:$0xff]
    %v85 = vld [vmem:[#allocation5 + $0x78] sm:$0xff]
    %v86 = vld [vmem:[%s2] sm:$0x1]
    %v88 = vperm.slane %v86, 0
    %90 = vmatpush.msra.mxu0 %v85
    %91 = vmatpush.msra.mxu0 %v84
    %92 = vmatpush.msra.mxu0 %v83
    %93 = vmatpush.msra.mxu0 %v82
    %94 = vmatpush.msra.mxu0 %v81
    %95 = vmatpush.msra.mxu0 %v80
    %96 = vmatpush.msra.mxu0 %v79
    %97 = vmatpush.msra.mxu0 %v78
    %98 = vmatpush.msra.mxu0 %v77
    %99 = vmatpush.msra.mxu0 %v76
    %100 = vmatpush.msra.mxu0 %v75
    %101 = vmatpush.msra.mxu0 %v74
    %102 = vmatpush.msra.mxu0 %v73
    %103 = vmatpush.msra.mxu0 %v72
    %104 = vmatpush.msra.mxu0 %v71
    %105 = vmatpush.msra.mxu0 %v70
    %106 = vmatmul.f32.gmra.mxu0 %v68
    %v107 = vpop.f32.mrf.mxu0
    %v108 = vadd.f32 %v88, %v107
    %109 = vmatmul.f32.gmra.mxu0 %v69
    %v110 = vpop.f32.mrf.mxu0
    %v111 = vadd.f32 %v88, %v110
    %112 = vdwg.mxu0
    %v113 = vmax.f32 %v108, 0.0
    %v114 = vmax.f32 %v111, 0.0
    %v115 = vld [vmem:[#allocation7] sm:$0xff]
    %v116 = vld [vmem:[#allocation7 + $0x8] sm:$0xff]
    %v117 = vld [vmem:[#allocation7 + $0x10] sm:$0xff]
    %v118 = vld [vmem:[#allocation7 + $0x18] sm:$0xff]
    %v119 = vld [vmem:[#allocation7 + $0x20] sm:$0xff]
    %v120 = vld [vmem:[#allocation7 + $0x28] sm:$0xff]
    %v121 = vld [vmem:[#allocation7 + $0x30] sm:$0xff]
    %v122 = vld [vmem:[#allocation7 + $0x38] sm:$0xff]
    %v123 = vld [vmem:[#allocation7 + $0x40] sm:$0xff]
    %v124 = vld [vmem:[#allocation7 + $0x48] sm:$0xff]
    %v125 = vld [vmem:[#allocation7 + $0x50] sm:$0xff]
    %v126 = vld [vmem:[#allocation7 + $0x58] sm:$0xff]
    %v127 = vld [vmem:[#allocation7 + $0x60] sm:$0xff]
    %v128 = vld [vmem:[#allocation7 + $0x68] sm:$0xff]
    %v129 = vld [vmem:[#allocation7 + $0x70] sm:$0xff]
    %v130 = vld [vmem:[#allocation7 + $0x78] sm:$0xff]
    %v131 = vld [vmem:[%s4] sm:$0x1]
    %v133 = vperm.slane %v131, 0
    %135 = vmatpush.msra.mxu0 %v130
    %136 = vmatpush.msra.mxu0 %v129
    %137 = vmatpush.msra.mxu0 %v128
    %138 = vmatpush.msra.mxu0 %v127
    %139 = vmatpush.msra.mxu0 %v126
    %140 = vmatpush.msra.mxu0 %v125
    %141 = vmatpush.msra.mxu0 %v124
    %142 = vmatpush.msra.mxu0 %v123
    %143 = vmatpush.msra.mxu0 %v122
    %144 = vmatpush.msra.mxu0 %v121
    %145 = vmatpush.msra.mxu0 %v120
    %146 = vmatpush.msra.mxu0 %v119
    %147 = vmatpush.msra.mxu0 %v118
    %148 = vmatpush.msra.mxu0 %v117
    %149 = vmatpush.msra.mxu0 %v116
    %150 = vmatpush.msra.mxu0 %v115
    %151 = vmatmul.f32.gmra.mxu0 %v113
    %v152 = vpop.f32.mrf.mxu0
    %v153 = vadd.f32 %v133, %v152
    %154 = vmatmul.f32.gmra.mxu0 %v114
    %v155 = vpop.f32.mrf.mxu0
    %v156 = vadd.f32 %v133, %v155
    %157 = vdwg.mxu0
    %158 = vst [vmem:[#allocation8] sm:$0xff] %v153
    %159 = vst [vmem:[#allocation8 + $0x8] sm:$0xff] %v156
    // Predicated region
    $region34: #{tpu_custom_call.1} parent=1 // pred_check
      _
    $region35: #{tpu_custom_call.1} parent=1 // pred_check_branch
      %161 = sbr.rel (0) target = $region37
    $region36: #{tpu_custom_call.1} parent=1 // pred_region
      %163 = vsyncadd [#allocation4], 0
      %s164 = sshll.u32 [#allocation8], 4
      %s165 = int_to_ptr.vmem [resolvable:$true] %s164
      %s166 = sshll.u32 %s5, 4
      %s167 = int_to_ptr.hbm [resolvable:$true] %s166
      %172 = dma.vmem_to_hbm [thread:$0]  %s165, 256, %s167, [#allocation4], 128, 128, 8
    $region37: #{tpu_custom_call.1} parent=1 // pred_fallthru
      _
    // Predicated region
    $region38: #{tpu_custom_call.1} parent=1 // pred_check
      _
    $region39: #{tpu_custom_call.1} parent=1 // pred_check_branch
      %174 = sbr.rel (0) target = $region41
    $region40: #{tpu_custom_call.1} parent=1 // pred_region
      %176 = dma.done [#allocation4], 256
    $region41: #{tpu_custom_call.1} parent=1 // pred_fallthru
      _
    %177 = vsyncpa [#allocation3], 1
    %178 = vsyncpa [#allocation6], 1
    %179 = vsyncpa [#allocation4], 1

</llo_original>
